<compile_context>
chip_gen: v5e
topology: v5e:2x2
jax: 0.10.0
libtpu: 0.0.40
codegen_flags: <defaults>
</compile_context>

<pallas_src>
import jax
import jax.numpy as jnp
from jax.experimental import pallas as pl
from jax.experimental.pallas import tpu as pltpu


def snn_chunk_kernel(x_ref, w1t_ref, b1_ref, leak_i_ref, leak_v_ref, thresh_ref,
                     w2_ref, leak2_ref, i0_ref, v0_ref, s0_ref, v20_ref,
                     out1_ref, out2_ref,
                     i_sc, v_sc, s_sc, v2_sc):
    t_chunk = out1_ref.shape[0]          # timesteps per chunk (static)
    batch = out1_ref.shape[2]            # batch size (static)

    c = pl.program_id(0)

    # Load initial recurrent state into VMEM scratch at the first chunk.
    @pl.when(c == 0)
    def _():
        i_sc[...] = i0_ref[...]
        v_sc[...] = v0_ref[...]
        s_sc[...] = s0_ref[...]
        v2_sc[...] = v20_ref[...]

    # --- Hoisted feed-forward GEMM for the whole chunk (one MXU pass) -----------
    # x chunk arrives pre-flattened as (t_chunk*batch, n_in).
    x = x_ref[0]
    ff = jnp.dot(x, w1t_ref[...], preferred_element_type=jnp.float32) + b1_ref[...]

    # --- VPU-only LIF / LI recurrence over the chunk (fully unrolled) -----------
    leak_i = leak_i_ref[...]
    leak_v = leak_v_ref[...]
    thresh = thresh_ref[...]
    w2_row = w2_ref[...]                 # (1, neurons)
    leak2 = leak2_ref[...]               # (1, 1)

    i = i_sc[...]
    v = v_sc[...]
    s = s_sc[...]
    v2 = v2_sc[...]

    v2_cols = []
    for t in range(t_chunk):             # static indices -> straight-line code
        ff_t = ff[t * batch:(t + 1) * batch, :]          # (batch, neurons)
        i = leak_i * i + ff_t
        v = leak_v * v * (1.0 - s) + i
        s = (v - thresh > 0.0).astype(jnp.float32)
        # L2 leaky integrator: VPU multiply + XLU lane reduce (no N=1 matmul).
        v2 = leak2 * v2 + jnp.sum(s * w2_row, axis=-1, keepdims=True)

        out1_ref[t, 0, :, :] = i
        out1_ref[t, 1, :, :] = v
        out1_ref[t, 2, :, :] = s
        v2_cols.append(v2)

    # Lane-dense chunk store for v_out: (batch, t_chunk); unpacked in the wrapper.
    out2_ref[0] = jnp.concatenate(v2_cols, axis=-1)

    # Carry recurrent state to the next chunk.
    i_sc[...] = i
    v_sc[...] = v
    s_sc[...] = s
    v2_sc[...] = v2


def l1_decoding_snn_forward(input_batch, params, state_l1_0, state_l2_0, t_chunk=16):
    """input_batch: (batch, seq, n_inputs) float32  (PyTorch convention)."""
    batch, seq, n_in = input_batch.shape
    neurons = params["w1"].shape[0]
    f32 = jnp.float32

    t_chunk = max(1, min(t_chunk, seq))
    n_chunks = pl.cdiv(seq, t_chunk)
    seq_pad = n_chunks * t_chunk

    # Glue: layout / shaping in plain JAX (time-major, chunk-flattened x).
    x_tm = jnp.transpose(input_batch, (1, 0, 2)).astype(f32)       # (seq, batch, n_in)
    if seq_pad != seq:
        x_tm = jnp.pad(x_tm, ((0, seq_pad - seq), (0, 0), (0, 0)))
    x_chunks = x_tm.reshape(n_chunks, t_chunk * batch, n_in)

    w1t = params["w1"].T.astype(f32)                               # (n_in, neurons)
    b1 = params["b1"].reshape(1, neurons).astype(f32)
    leak_i = params["leak_i"].reshape(1, neurons).astype(f32)
    leak_v = params["leak_v"].reshape(1, neurons).astype(f32)
    thresh = params["thresh"].reshape(1, neurons).astype(f32)
    w2 = params["w2"].reshape(1, neurons).astype(f32)              # row layout
    leak2 = params["leak2"].reshape(1, 1).astype(f32)
    i0, v0, s0 = [st.astype(f32) for st in state_l1_0]             # each (batch, neurons)
    v20 = state_l2_0[0].astype(f32)                                # (batch, 1)

    def const(shape):
        return pl.BlockSpec(shape, lambda c: tuple(0 for _ in shape))

    grid_spec = pltpu.PrefetchScalarGridSpec(
        num_scalar_prefetch=0,
        grid=(n_chunks,),
        in_specs=[
            pl.BlockSpec((1, t_chunk * batch, n_in), lambda c: (c, 0, 0)),  # x chunk
            const((n_in, neurons)),                                         # W1^T
            const((1, neurons)),                                            # b1
            const((1, neurons)),                                            # leak_i
            const((1, neurons)),                                            # leak_v
            const((1, neurons)),                                            # thresh
            const((1, neurons)),                                            # W2 row
            const((1, 1)),                                                  # leak2
            const((batch, neurons)),                                        # i0
            const((batch, neurons)),                                        # v0
            const((batch, neurons)),                                        # s0
            const((batch, 1)),                                              # v2_0
        ],
        out_specs=[
            pl.BlockSpec((t_chunk, 3, batch, neurons), lambda c: (c, 0, 0, 0)),
            pl.BlockSpec((1, batch, t_chunk), lambda c: (c, 0, 0)),
        ],
        scratch_shapes=[
            pltpu.VMEM((batch, neurons), jnp.float32),   # i
            pltpu.VMEM((batch, neurons), jnp.float32),   # v
            pltpu.VMEM((batch, neurons), jnp.float32),   # s
            pltpu.VMEM((batch, 1), jnp.float32),         # v2
        ],
    )

    out1_raw, out2_raw = pl.pallas_call(
        snn_chunk_kernel,
        grid_spec=grid_spec,
        out_shape=[
            jax.ShapeDtypeStruct((seq_pad, 3, batch, neurons), jnp.float32),
            jax.ShapeDtypeStruct((n_chunks, batch, t_chunk), jnp.float32),
        ],
        compiler_params=pltpu.CompilerParams(dimension_semantics=("arbitrary",)),
    )(x_chunks, w1t, b1, leak_i, leak_v, thresh, w2, leak2, i0, v0, s0, v20)

    out1 = out1_raw[:seq]
    out2 = (jnp.transpose(out2_raw, (0, 2, 1))
            .reshape(seq_pad, batch)[:seq]
            .reshape(seq, 1, batch, 1))
    return out1, out2


def reference_forward(input_batch, params, state_l1_0, state_l2_0):
    """Pure-JAX reference mirroring the PyTorch per-timestep loop."""
    w1, b1 = params["w1"], params["b1"]
    leak_i, leak_v, thresh = params["leak_i"], params["leak_v"], params["thresh"]
    w2, leak2 = params["w2"], params["leak2"]
    x_tm = jnp.transpose(input_batch, (1, 0, 2))

    def step(carry, xt):
        i, v, s, v2 = carry
        ff = xt @ w1.T + b1
        i_new = leak_i * i + ff
        v_new = leak_v * v * (1.0 - s) + i_new
        s_new = (v_new - thresh > 0.0).astype(jnp.float32)
        v2_new = leak2 * v2 + s_new @ w2.T
        return (i_new, v_new, s_new, v2_new), (jnp.stack([i_new, v_new, s_new]),
                                               v2_new[None])

    i0, v0, s0 = state_l1_0
    v20 = state_l2_0[0]
    _, (st1, st2) = jax.lax.scan(step, (i0, v0, s0, v20), x_tm)
    return st1, st2


if __name__ == "__main__":
    batch, seq, n_in, neurons = 2, 8, 16, 32

    key = jax.random.PRNGKey(0)
    ks = jax.random.split(key, 8)
    params = {
        "w1": jax.random.normal(ks[0], (neurons, n_in), jnp.float32) * 0.5,
        "b1": jax.random.normal(ks[1], (neurons,), jnp.float32) * 0.1,
        "leak_i": jax.random.uniform(ks[2], (neurons,), jnp.float32, 0.3, 0.95),
        "leak_v": jax.random.uniform(ks[3], (neurons,), jnp.float32, 0.3, 0.95),
        "thresh": jnp.ones((neurons,), jnp.float32),
        "w2": jax.random.normal(ks[4], (1, neurons), jnp.float32) * 0.5,
        "leak2": jax.random.uniform(ks[5], (1,), jnp.float32, 0.5, 0.95),
    }
    x = jax.random.normal(ks[6], (batch, seq, n_in), jnp.float32)

    state_l1_0 = (jnp.zeros((batch, neurons), jnp.float32),
                  jnp.zeros((batch, neurons), jnp.float32),
                  jnp.zeros((batch, neurons), jnp.float32))
    state_l2_0 = jnp.zeros((1, batch, 1), jnp.float32)

    out1, out2 = jax.block_until_ready(
        l1_decoding_snn_forward(x, params, state_l1_0, state_l2_0))

    ref1, ref2 = jax.block_until_ready(
        reference_forward(x, params, state_l1_0, state_l2_0))

    assert out1.shape == (seq, 3, batch, neurons)
    assert out2.shape == (seq, 1, batch, 1)
    assert jnp.allclose(out1, ref1, atol=1e-5, rtol=1e-5)
    assert jnp.allclose(out2, ref2, atol=1e-5, rtol=1e-5)

    print("KERNEL_OK")
</pallas_src>

<mosaic_0001>
module attributes {stable_mosaic.version = 11 : i64} {
  func.func @snn_chunk_kernel(%arg0: i32, %arg1: memref<1x16x16xf32, #tpu.memory_space<vmem>>, %arg2: memref<16x32xf32, #tpu.memory_space<vmem>>, %arg3: memref<1x32xf32, #tpu.memory_space<vmem>>, %arg4: memref<1x32xf32, #tpu.memory_space<vmem>>, %arg5: memref<1x32xf32, #tpu.memory_space<vmem>>, %arg6: memref<1x32xf32, #tpu.memory_space<vmem>>, %arg7: memref<1x32xf32, #tpu.memory_space<vmem>>, %arg8: memref<1x1xf32, #tpu.memory_space<vmem>>, %arg9: memref<2x32xf32, #tpu.memory_space<vmem>>, %arg10: memref<2x32xf32, #tpu.memory_space<vmem>>, %arg11: memref<2x32xf32, #tpu.memory_space<vmem>>, %arg12: memref<2x1xf32, #tpu.memory_space<vmem>>, %arg13: memref<8x3x2x32xf32, #tpu.memory_space<vmem>>, %arg14: memref<1x2x8xf32, #tpu.memory_space<vmem>>, %arg15: memref<2x32xf32, #tpu.memory_space<vmem>>, %arg16: memref<2x32xf32, #tpu.memory_space<vmem>>, %arg17: memref<2x32xf32, #tpu.memory_space<vmem>>, %arg18: memref<2x1xf32, #tpu.memory_space<vmem>>) attributes {dimension_semantics = [#tpu.dimension_semantics<arbitrary>], iteration_bounds = array<i64: 1>, scalar_prefetch = 0 : i64, scratch_operands = 4 : i64, tpu.core_type = #tpu.core_type<tc>, window_params = [{transform_indices = @transform_0, window_bounds = array<i64: 1, 16, 16>}, {pipeline_mode = #tpu.pipeline_mode<synchronous>, transform_indices = @transform_1, window_bounds = array<i64: 16, 32>}, {pipeline_mode = #tpu.pipeline_mode<synchronous>, transform_indices = @transform_2, window_bounds = array<i64: 1, 32>}, {pipeline_mode = #tpu.pipeline_mode<synchronous>, transform_indices = @transform_3, window_bounds = array<i64: 1, 32>}, {pipeline_mode = #tpu.pipeline_mode<synchronous>, transform_indices = @transform_4, window_bounds = array<i64: 1, 32>}, {pipeline_mode = #tpu.pipeline_mode<synchronous>, transform_indices = @transform_5, window_bounds = array<i64: 1, 32>}, {pipeline_mode = #tpu.pipeline_mode<synchronous>, transform_indices = @transform_6, window_bounds = array<i64: 1, 32>}, {pipeline_mode = #tpu.pipeline_mode<synchronous>, transform_indices = @transform_7, window_bounds = array<i64: 1, 1>}, {pipeline_mode = #tpu.pipeline_mode<synchronous>, transform_indices = @transform_8, window_bounds = array<i64: 2, 32>}, {pipeline_mode = #tpu.pipeline_mode<synchronous>, transform_indices = @transform_9, window_bounds = array<i64: 2, 32>}, {pipeline_mode = #tpu.pipeline_mode<synchronous>, transform_indices = @transform_10, window_bounds = array<i64: 2, 32>}, {pipeline_mode = #tpu.pipeline_mode<synchronous>, transform_indices = @transform_11, window_bounds = array<i64: 2, 1>}, {transform_indices = @transform_12, window_bounds = array<i64: 8, 3, 2, 32>}, {transform_indices = @transform_13, window_bounds = array<i64: 1, 2, 8>}]} {
    %c0_i32 = arith.constant 0 : i32
    %0 = arith.cmpi eq, %arg0, %c0_i32 : i32
    %1 = arith.extui %0 : i1 to i32
    %c0_i32_0 = arith.constant 0 : i32
    %2 = arith.cmpi ne, %1, %c0_i32_0 : i32
    scf.if %2 {
      %c0_149 = arith.constant 0 : index
      %c0_150 = arith.constant 0 : index
      %283 = vector.load %arg9[%c0_149, %c0_150] : memref<2x32xf32, #tpu.memory_space<vmem>>, vector<2x32xf32>
      %c0_151 = arith.constant 0 : index
      %c0_152 = arith.constant 0 : index
      %284 = vector.load %arg15[%c0_151, %c0_152] : memref<2x32xf32, #tpu.memory_space<vmem>>, vector<2x32xf32>
      tpu.vector_store %arg15[%c0_151, %c0_152], %283 {strides = array<i32>} : memref<2x32xf32, #tpu.memory_space<vmem>>, vector<2x32xf32>,
      %c0_153 = arith.constant 0 : index
      %c0_154 = arith.constant 0 : index
      %285 = vector.load %arg10[%c0_153, %c0_154] : memref<2x32xf32, #tpu.memory_space<vmem>>, vector<2x32xf32>
      %c0_155 = arith.constant 0 : index
      %c0_156 = arith.constant 0 : index
      %286 = vector.load %arg16[%c0_155, %c0_156] : memref<2x32xf32, #tpu.memory_space<vmem>>, vector<2x32xf32>
      tpu.vector_store %arg16[%c0_155, %c0_156], %285 {strides = array<i32>} : memref<2x32xf32, #tpu.memory_space<vmem>>, vector<2x32xf32>,
      %c0_157 = arith.constant 0 : index
      %c0_158 = arith.constant 0 : index
      %287 = vector.load %arg11[%c0_157, %c0_158] : memref<2x32xf32, #tpu.memory_space<vmem>>, vector<2x32xf32>
      %c0_159 = arith.constant 0 : index
      %c0_160 = arith.constant 0 : index
      %288 = vector.load %arg17[%c0_159, %c0_160] : memref<2x32xf32, #tpu.memory_space<vmem>>, vector<2x32xf32>
      tpu.vector_store %arg17[%c0_159, %c0_160], %287 {strides = array<i32>} : memref<2x32xf32, #tpu.memory_space<vmem>>, vector<2x32xf32>,
      %c0_161 = arith.constant 0 : index
      %c0_162 = arith.constant 0 : index
      %289 = vector.load %arg12[%c0_161, %c0_162] : memref<2x1xf32, #tpu.memory_space<vmem>>, vector<2x1xf32>
      %c0_163 = arith.constant 0 : index
      %c0_164 = arith.constant 0 : index
      %290 = vector.load %arg18[%c0_163, %c0_164] : memref<2x1xf32, #tpu.memory_space<vmem>>, vector<2x1xf32>
      tpu.vector_store %arg18[%c0_163, %c0_164], %289 {strides = array<i32>} : memref<2x1xf32, #tpu.memory_space<vmem>>, vector<2x1xf32>,
    } else {
    }
    %c0 = arith.constant 0 : index
    %c0_1 = arith.constant 0 : index
    %c0_2 = arith.constant 0 : index
    %3 = vector.load %arg1[%c0, %c0_1, %c0_2] : memref<1x16x16xf32, #tpu.memory_space<vmem>>, vector<1x16x16xf32>
    %4 = vector.shape_cast %3 : vector<1x16x16xf32> to vector<16x16xf32>
    %c0_3 = arith.constant 0 : index
    %c0_4 = arith.constant 0 : index
    %5 = vector.load %arg2[%c0_3, %c0_4] : memref<16x32xf32, #tpu.memory_space<vmem>>, vector<16x32xf32>
    %cst = arith.constant dense<0.000000e+00> : vector<16x32xf32>
    %6 = tpu.matmul %4, %5, %cst {dimension_numbers = #tpu.dot_dimension_numbers<[1], [0], [0], [1], [0, 0, 1, 1], [], []>} : vector<16x16xf32>, vector<16x32xf32>, vector<16x32xf32> -> vector<16x32xf32>
    %c0_5 = arith.constant 0 : index
    %c0_6 = arith.constant 0 : index
    %7 = vector.load %arg3[%c0_5, %c0_6] : memref<1x32xf32, #tpu.memory_space<vmem>>, vector<1x32xf32>
    %8 = vector.broadcast %7 : vector<1x32xf32> to vector<16x32xf32>
    %9 = arith.addf %6, %8 : vector<16x32xf32>
    %c0_7 = arith.constant 0 : index
    %c0_8 = arith.constant 0 : index
    %10 = vector.load %arg4[%c0_7, %c0_8] : memref<1x32xf32, #tpu.memory_space<vmem>>, vector<1x32xf32>
    %c0_9 = arith.constant 0 : index
    %c0_10 = arith.constant 0 : index
    %11 = vector.load %arg5[%c0_9, %c0_10] : memref<1x32xf32, #tpu.memory_space<vmem>>, vector<1x32xf32>
    %c0_11 = arith.constant 0 : index
    %c0_12 = arith.constant 0 : index
    %12 = vector.load %arg6[%c0_11, %c0_12] : memref<1x32xf32, #tpu.memory_space<vmem>>, vector<1x32xf32>
    %c0_13 = arith.constant 0 : index
    %c0_14 = arith.constant 0 : index
    %13 = vector.load %arg7[%c0_13, %c0_14] : memref<1x32xf32, #tpu.memory_space<vmem>>, vector<1x32xf32>
    %c0_15 = arith.constant 0 : index
    %c0_16 = arith.constant 0 : index
    %14 = vector.load %arg8[%c0_15, %c0_16] : memref<1x1xf32, #tpu.memory_space<vmem>>, vector<1x1xf32>
    %c0_17 = arith.constant 0 : index
    %c0_18 = arith.constant 0 : index
    %15 = vector.load %arg15[%c0_17, %c0_18] : memref<2x32xf32, #tpu.memory_space<vmem>>, vector<2x32xf32>
    %c0_19 = arith.constant 0 : index
    %c0_20 = arith.constant 0 : index
    %16 = vector.load %arg16[%c0_19, %c0_20] : memref<2x32xf32, #tpu.memory_space<vmem>>, vector<2x32xf32>
    %c0_21 = arith.constant 0 : index
    %c0_22 = arith.constant 0 : index
    %17 = vector.load %arg17[%c0_21, %c0_22] : memref<2x32xf32, #tpu.memory_space<vmem>>, vector<2x32xf32>
    %c0_23 = arith.constant 0 : index
    %c0_24 = arith.constant 0 : index
    %18 = vector.load %arg18[%c0_23, %c0_24] : memref<2x1xf32, #tpu.memory_space<vmem>>, vector<2x1xf32>
    %19 = vector.extract_strided_slice %9 {offsets = [0, 0], sizes = [2, 32], strides = [1, 1]} : vector<16x32xf32> to vector<2x32xf32>
    %20 = vector.broadcast %10 : vector<1x32xf32> to vector<2x32xf32>
    %21 = arith.mulf %20, %15 : vector<2x32xf32>
    %22 = arith.addf %21, %19 : vector<2x32xf32>
    %23 = vector.broadcast %11 : vector<1x32xf32> to vector<2x32xf32>
    %24 = arith.mulf %23, %16 : vector<2x32xf32>
    %cst_25 = arith.constant 1.000000e+00 : f32
    %25 = vector.broadcast %cst_25 : f32 to vector<2x32xf32>
    %26 = arith.subf %25, %17 : vector<2x32xf32>
    %27 = arith.mulf %24, %26 : vector<2x32xf32>
    %28 = arith.addf %27, %22 : vector<2x32xf32>
    %29 = vector.broadcast %12 : vector<1x32xf32> to vector<2x32xf32>
    %30 = arith.subf %28, %29 : vector<2x32xf32>
    %cst_26 = arith.constant 0.000000e+00 : f32
    %31 = vector.broadcast %cst_26 : f32 to vector<2x32xf32>
    %32 = arith.cmpf ogt, %30, %31 : vector<2x32xf32>
    %33 = arith.extui %32 : vector<2x32xi1> to vector<2x32xi32>
    %34 = arith.sitofp %33 : vector<2x32xi32> to vector<2x32xf32>
    %35 = vector.broadcast %14 : vector<1x1xf32> to vector<2x1xf32>
    %36 = arith.mulf %35, %18 : vector<2x1xf32>
    %37 = vector.broadcast %13 : vector<1x32xf32> to vector<2x32xf32>
    %38 = arith.mulf %34, %37 : vector<2x32xf32>
    %cst_27 = arith.constant dense<0.000000e+00> : vector<2xf32>
    %39 = vector.multi_reduction <add>, %38, %cst_27 [1] : vector<2x32xf32> to vector<2xf32>
    %40 = vector.shape_cast %39 : vector<2xf32> to vector<2x1xf32>
    %41 = arith.addf %36, %40 : vector<2x1xf32>
    %c0_28 = arith.constant 0 : index
    %c0_29 = arith.constant 0 : index
    %c0_30 = arith.constant 0 : index
    %c0_31 = arith.constant 0 : index
    %42 = vector.load %arg13[%c0_28, %c0_29, %c0_30, %c0_31] : memref<8x3x2x32xf32, #tpu.memory_space<vmem>>, vector<1x1x2x32xf32>
    %43 = vector.shape_cast %42 : vector<1x1x2x32xf32> to vector<2x32xf32>
    %44 = vector.shape_cast %22 : vector<2x32xf32> to vector<1x1x2x32xf32>
    tpu.vector_store %arg13[%c0_28, %c0_29, %c0_30, %c0_31], %44 {strides = array<i32>} : memref<8x3x2x32xf32, #tpu.memory_space<vmem>>, vector<1x1x2x32xf32>,
    %c0_32 = arith.constant 0 : index
    %c1 = arith.constant 1 : index
    %c0_33 = arith.constant 0 : index
    %c0_34 = arith.constant 0 : index
    %45 = vector.load %arg13[%c0_32, %c1, %c0_33, %c0_34] : memref<8x3x2x32xf32, #tpu.memory_space<vmem>>, vector<1x1x2x32xf32>
    %46 = vector.shape_cast %45 : vector<1x1x2x32xf32> to vector<2x32xf32>
    %47 = vector.shape_cast %28 : vector<2x32xf32> to vector<1x1x2x32xf32>
    tpu.vector_store %arg13[%c0_32, %c1, %c0_33, %c0_34], %47 {strides = array<i32>} : memref<8x3x2x32xf32, #tpu.memory_space<vmem>>, vector<1x1x2x32xf32>,
    %c0_35 = arith.constant 0 : index
    %c2 = arith.constant 2 : index
    %c0_36 = arith.constant 0 : index
    %c0_37 = arith.constant 0 : index
    %48 = vector.load %arg13[%c0_35, %c2, %c0_36, %c0_37] : memref<8x3x2x32xf32, #tpu.memory_space<vmem>>, vector<1x1x2x32xf32>
    %49 = vector.shape_cast %48 : vector<1x1x2x32xf32> to vector<2x32xf32>
    %50 = vector.shape_cast %34 : vector<2x32xf32> to vector<1x1x2x32xf32>
    tpu.vector_store %arg13[%c0_35, %c2, %c0_36, %c0_37], %50 {strides = array<i32>} : memref<8x3x2x32xf32, #tpu.memory_space<vmem>>, vector<1x1x2x32xf32>,
    %51 = vector.extract_strided_slice %9 {offsets = [2, 0], sizes = [2, 32], strides = [1, 1]} : vector<16x32xf32> to vector<2x32xf32>
    %52 = vector.broadcast %10 : vector<1x32xf32> to vector<2x32xf32>
    %53 = arith.mulf %52, %22 : vector<2x32xf32>
    %54 = arith.addf %53, %51 : vector<2x32xf32>
    %55 = vector.broadcast %11 : vector<1x32xf32> to vector<2x32xf32>
    %56 = arith.mulf %55, %28 : vector<2x32xf32>
    %cst_38 = arith.constant 1.000000e+00 : f32
    %57 = vector.broadcast %cst_38 : f32 to vector<2x32xf32>
    %58 = arith.subf %57, %34 : vector<2x32xf32>
    %59 = arith.mulf %56, %58 : vector<2x32xf32>
    %60 = arith.addf %59, %54 : vector<2x32xf32>
    %61 = vector.broadcast %12 : vector<1x32xf32> to vector<2x32xf32>
    %62 = arith.subf %60, %61 : vector<2x32xf32>
    %cst_39 = arith.constant 0.000000e+00 : f32
    %63 = vector.broadcast %cst_39 : f32 to vector<2x32xf32>
    %64 = arith.cmpf ogt, %62, %63 : vector<2x32xf32>
    %65 = arith.extui %64 : vector<2x32xi1> to vector<2x32xi32>
    %66 = arith.sitofp %65 : vector<2x32xi32> to vector<2x32xf32>
    %67 = vector.broadcast %14 : vector<1x1xf32> to vector<2x1xf32>
    %68 = arith.mulf %67, %41 : vector<2x1xf32>
    %69 = vector.broadcast %13 : vector<1x32xf32> to vector<2x32xf32>
    %70 = arith.mulf %66, %69 : vector<2x32xf32>
    %cst_40 = arith.constant dense<0.000000e+00> : vector<2xf32>
    %71 = vector.multi_reduction <add>, %70, %cst_40 [1] : vector<2x32xf32> to vector<2xf32>
    %72 = vector.shape_cast %71 : vector<2xf32> to vector<2x1xf32>
    %73 = arith.addf %68, %72 : vector<2x1xf32>
    %c1_41 = arith.constant 1 : index
    %c0_42 = arith.constant 0 : index
    %c0_43 = arith.constant 0 : index
    %c0_44 = arith.constant 0 : index
    %74 = vector.load %arg13[%c1_41, %c0_42, %c0_43, %c0_44] : memref<8x3x2x32xf32, #tpu.memory_space<vmem>>, vector<1x1x2x32xf32>
    %75 = vector.shape_cast %74 : vector<1x1x2x32xf32> to vector<2x32xf32>
    %76 = vector.shape_cast %54 : vector<2x32xf32> to vector<1x1x2x32xf32>
    tpu.vector_store %arg13[%c1_41, %c0_42, %c0_43, %c0_44], %76 {strides = array<i32>} : memref<8x3x2x32xf32, #tpu.memory_space<vmem>>, vector<1x1x2x32xf32>,
    %c1_45 = arith.constant 1 : index
    %c1_46 = arith.constant 1 : index
    %c0_47 = arith.constant 0 : index
    %c0_48 = arith.constant 0 : index
    %77 = vector.load %arg13[%c1_45, %c1_46, %c0_47, %c0_48] : memref<8x3x2x32xf32, #tpu.memory_space<vmem>>, vector<1x1x2x32xf32>
    %78 = vector.shape_cast %77 : vector<1x1x2x32xf32> to vector<2x32xf32>
    %79 = vector.shape_cast %60 : vector<2x32xf32> to vector<1x1x2x32xf32>
    tpu.vector_store %arg13[%c1_45, %c1_46, %c0_47, %c0_48], %79 {strides = array<i32>} : memref<8x3x2x32xf32, #tpu.memory_space<vmem>>, vector<1x1x2x32xf32>,
    %c1_49 = arith.constant 1 : index
    %c2_50 = arith.constant 2 : index
    %c0_51 = arith.constant 0 : index
    %c0_52 = arith.constant 0 : index
    %80 = vector.load %arg13[%c1_49, %c2_50, %c0_51, %c0_52] : memref<8x3x2x32xf32, #tpu.memory_space<vmem>>, vector<1x1x2x32xf32>
    %81 = vector.shape_cast %80 : vector<1x1x2x32xf32> to vector<2x32xf32>
    %82 = vector.shape_cast %66 : vector<2x32xf32> to vector<1x1x2x32xf32>
    tpu.vector_store %arg13[%c1_49, %c2_50, %c0_51, %c0_52], %82 {strides = array<i32>} : memref<8x3x2x32xf32, #tpu.memory_space<vmem>>, vector<1x1x2x32xf32>,
    %83 = vector.extract_strided_slice %9 {offsets = [4, 0], sizes = [2, 32], strides = [1, 1]} : vector<16x32xf32> to vector<2x32xf32>
    %84 = vector.broadcast %10 : vector<1x32xf32> to vector<2x32xf32>
    %85 = arith.mulf %84, %54 : vector<2x32xf32>
    %86 = arith.addf %85, %83 : vector<2x32xf32>
    %87 = vector.broadcast %11 : vector<1x32xf32> to vector<2x32xf32>
    %88 = arith.mulf %87, %60 : vector<2x32xf32>
    %cst_53 = arith.constant 1.000000e+00 : f32
    %89 = vector.broadcast %cst_53 : f32 to vector<2x32xf32>
    %90 = arith.subf %89, %66 : vector<2x32xf32>
    %91 = arith.mulf %88, %90 : vector<2x32xf32>
    %92 = arith.addf %91, %86 : vector<2x32xf32>
    %93 = vector.broadcast %12 : vector<1x32xf32> to vector<2x32xf32>
    %94 = arith.subf %92, %93 : vector<2x32xf32>
    %cst_54 = arith.constant 0.000000e+00 : f32
    %95 = vector.broadcast %cst_54 : f32 to vector<2x32xf32>
    %96 = arith.cmpf ogt, %94, %95 : vector<2x32xf32>
    %97 = arith.extui %96 : vector<2x32xi1> to vector<2x32xi32>
    %98 = arith.sitofp %97 : vector<2x32xi32> to vector<2x32xf32>
    %99 = vector.broadcast %14 : vector<1x1xf32> to vector<2x1xf32>
    %100 = arith.mulf %99, %73 : vector<2x1xf32>
    %101 = vector.broadcast %13 : vector<1x32xf32> to vector<2x32xf32>
    %102 = arith.mulf %98, %101 : vector<2x32xf32>
    %cst_55 = arith.constant dense<0.000000e+00> : vector<2xf32>
    %103 = vector.multi_reduction <add>, %102, %cst_55 [1] : vector<2x32xf32> to vector<2xf32>
    %104 = vector.shape_cast %103 : vector<2xf32> to vector<2x1xf32>
    %105 = arith.addf %100, %104 : vector<2x1xf32>
    %c2_56 = arith.constant 2 : index
    %c0_57 = arith.constant 0 : index
    %c0_58 = arith.constant 0 : index
    %c0_59 = arith.constant 0 : index
    %106 = vector.load %arg13[%c2_56, %c0_57, %c0_58, %c0_59] : memref<8x3x2x32xf32, #tpu.memory_space<vmem>>, vector<1x1x2x32xf32>
    %107 = vector.shape_cast %106 : vector<1x1x2x32xf32> to vector<2x32xf32>
    %108 = vector.shape_cast %86 : vector<2x32xf32> to vector<1x1x2x32xf32>
    tpu.vector_store %arg13[%c2_56, %c0_57, %c0_58, %c0_59], %108 {strides = array<i32>} : memref<8x3x2x32xf32, #tpu.memory_space<vmem>>, vector<1x1x2x32xf32>,
    %c2_60 = arith.constant 2 : index
    %c1_61 = arith.constant 1 : index
    %c0_62 = arith.constant 0 : index
    %c0_63 = arith.constant 0 : index
    %109 = vector.load %arg13[%c2_60, %c1_61, %c0_62, %c0_63] : memref<8x3x2x32xf32, #tpu.memory_space<vmem>>, vector<1x1x2x32xf32>
    %110 = vector.shape_cast %109 : vector<1x1x2x32xf32> to vector<2x32xf32>
    %111 = vector.shape_cast %92 : vector<2x32xf32> to vector<1x1x2x32xf32>
    tpu.vector_store %arg13[%c2_60, %c1_61, %c0_62, %c0_63], %111 {strides = array<i32>} : memref<8x3x2x32xf32, #tpu.memory_space<vmem>>, vector<1x1x2x32xf32>,
    %c2_64 = arith.constant 2 : index
    %c2_65 = arith.constant 2 : index
    %c0_66 = arith.constant 0 : index
    %c0_67 = arith.constant 0 : index
    %112 = vector.load %arg13[%c2_64, %c2_65, %c0_66, %c0_67] : memref<8x3x2x32xf32, #tpu.memory_space<vmem>>, vector<1x1x2x32xf32>
    %113 = vector.shape_cast %112 : vector<1x1x2x32xf32> to vector<2x32xf32>
    %114 = vector.shape_cast %98 : vector<2x32xf32> to vector<1x1x2x32xf32>
    tpu.vector_store %arg13[%c2_64, %c2_65, %c0_66, %c0_67], %114 {strides = array<i32>} : memref<8x3x2x32xf32, #tpu.memory_space<vmem>>, vector<1x1x2x32xf32>,
    %115 = vector.extract_strided_slice %9 {offsets = [6, 0], sizes = [2, 32], strides = [1, 1]} : vector<16x32xf32> to vector<2x32xf32>
    %116 = vector.broadcast %10 : vector<1x32xf32> to vector<2x32xf32>
    %117 = arith.mulf %116, %86 : vector<2x32xf32>
    %118 = arith.addf %117, %115 : vector<2x32xf32>
    %119 = vector.broadcast %11 : vector<1x32xf32> to vector<2x32xf32>
    %120 = arith.mulf %119, %92 : vector<2x32xf32>
    %cst_68 = arith.constant 1.000000e+00 : f32
    %121 = vector.broadcast %cst_68 : f32 to vector<2x32xf32>
    %122 = arith.subf %121, %98 : vector<2x32xf32>
    %123 = arith.mulf %120, %122 : vector<2x32xf32>
    %124 = arith.addf %123, %118 : vector<2x32xf32>
    %125 = vector.broadcast %12 : vector<1x32xf32> to vector<2x32xf32>
    %126 = arith.subf %124, %125 : vector<2x32xf32>
    %cst_69 = arith.constant 0.000000e+00 : f32
    %127 = vector.broadcast %cst_69 : f32 to vector<2x32xf32>
    %128 = arith.cmpf ogt, %126, %127 : vector<2x32xf32>
    %129 = arith.extui %128 : vector<2x32xi1> to vector<2x32xi32>
    %130 = arith.sitofp %129 : vector<2x32xi32> to vector<2x32xf32>
    %131 = vector.broadcast %14 : vector<1x1xf32> to vector<2x1xf32>
    %132 = arith.mulf %131, %105 : vector<2x1xf32>
    %133 = vector.broadcast %13 : vector<1x32xf32> to vector<2x32xf32>
    %134 = arith.mulf %130, %133 : vector<2x32xf32>
    %cst_70 = arith.constant dense<0.000000e+00> : vector<2xf32>
    %135 = vector.multi_reduction <add>, %134, %cst_70 [1] : vector<2x32xf32> to vector<2xf32>
    %136 = vector.shape_cast %135 : vector<2xf32> to vector<2x1xf32>
    %137 = arith.addf %132, %136 : vector<2x1xf32>
    %c3 = arith.constant 3 : index
    %c0_71 = arith.constant 0 : index
    %c0_72 = arith.constant 0 : index
    %c0_73 = arith.constant 0 : index
    %138 = vector.load %arg13[%c3, %c0_71, %c0_72, %c0_73] : memref<8x3x2x32xf32, #tpu.memory_space<vmem>>, vector<1x1x2x32xf32>
    %139 = vector.shape_cast %138 : vector<1x1x2x32xf32> to vector<2x32xf32>
    %140 = vector.shape_cast %118 : vector<2x32xf32> to vector<1x1x2x32xf32>
    tpu.vector_store %arg13[%c3, %c0_71, %c0_72, %c0_73], %140 {strides = array<i32>} : memref<8x3x2x32xf32, #tpu.memory_space<vmem>>, vector<1x1x2x32xf32>,
    %c3_74 = arith.constant 3 : index
    %c1_75 = arith.constant 1 : index
    %c0_76 = arith.constant 0 : index
    %c0_77 = arith.constant 0 : index
    %141 = vector.load %arg13[%c3_74, %c1_75, %c0_76, %c0_77] : memref<8x3x2x32xf32, #tpu.memory_space<vmem>>, vector<1x1x2x32xf32>
    %142 = vector.shape_cast %141 : vector<1x1x2x32xf32> to vector<2x32xf32>
    %143 = vector.shape_cast %124 : vector<2x32xf32> to vector<1x1x2x32xf32>
    tpu.vector_store %arg13[%c3_74, %c1_75, %c0_76, %c0_77], %143 {strides = array<i32>} : memref<8x3x2x32xf32, #tpu.memory_space<vmem>>, vector<1x1x2x32xf32>,
    %c3_78 = arith.constant 3 : index
    %c2_79 = arith.constant 2 : index
    %c0_80 = arith.constant 0 : index
    %c0_81 = arith.constant 0 : index
    %144 = vector.load %arg13[%c3_78, %c2_79, %c0_80, %c0_81] : memref<8x3x2x32xf32, #tpu.memory_space<vmem>>, vector<1x1x2x32xf32>
    %145 = vector.shape_cast %144 : vector<1x1x2x32xf32> to vector<2x32xf32>
    %146 = vector.shape_cast %130 : vector<2x32xf32> to vector<1x1x2x32xf32>
    tpu.vector_store %arg13[%c3_78, %c2_79, %c0_80, %c0_81], %146 {strides = array<i32>} : memref<8x3x2x32xf32, #tpu.memory_space<vmem>>, vector<1x1x2x32xf32>,
    %147 = vector.extract_strided_slice %9 {offsets = [8, 0], sizes = [2, 32], strides = [1, 1]} : vector<16x32xf32> to vector<2x32xf32>
    %148 = vector.broadcast %10 : vector<1x32xf32> to vector<2x32xf32>
    %149 = arith.mulf %148, %118 : vector<2x32xf32>
    %150 = arith.addf %149, %147 : vector<2x32xf32>
    %151 = vector.broadcast %11 : vector<1x32xf32> to vector<2x32xf32>
    %152 = arith.mulf %151, %124 : vector<2x32xf32>
    %cst_82 = arith.constant 1.000000e+00 : f32
    %153 = vector.broadcast %cst_82 : f32 to vector<2x32xf32>
    %154 = arith.subf %153, %130 : vector<2x32xf32>
    %155 = arith.mulf %152, %154 : vector<2x32xf32>
    %156 = arith.addf %155, %150 : vector<2x32xf32>
    %157 = vector.broadcast %12 : vector<1x32xf32> to vector<2x32xf32>
    %158 = arith.subf %156, %157 : vector<2x32xf32>
    %cst_83 = arith.constant 0.000000e+00 : f32
    %159 = vector.broadcast %cst_83 : f32 to vector<2x32xf32>
    %160 = arith.cmpf ogt, %158, %159 : vector<2x32xf32>
    %161 = arith.extui %160 : vector<2x32xi1> to vector<2x32xi32>
    %162 = arith.sitofp %161 : vector<2x32xi32> to vector<2x32xf32>
    %163 = vector.broadcast %14 : vector<1x1xf32> to vector<2x1xf32>
    %164 = arith.mulf %163, %137 : vector<2x1xf32>
    %165 = vector.broadcast %13 : vector<1x32xf32> to vector<2x32xf32>
    %166 = arith.mulf %162, %165 : vector<2x32xf32>
    %cst_84 = arith.constant dense<0.000000e+00> : vector<2xf32>
    %167 = vector.multi_reduction <add>, %166, %cst_84 [1] : vector<2x32xf32> to vector<2xf32>
    %168 = vector.shape_cast %167 : vector<2xf32> to vector<2x1xf32>
    %169 = arith.addf %164, %168 : vector<2x1xf32>
    %c4 = arith.constant 4 : index
    %c0_85 = arith.constant 0 : index
    %c0_86 = arith.constant 0 : index
    %c0_87 = arith.constant 0 : index
    %170 = vector.load %arg13[%c4, %c0_85, %c0_86, %c0_87] : memref<8x3x2x32xf32, #tpu.memory_space<vmem>>, vector<1x1x2x32xf32>
    %171 = vector.shape_cast %170 : vector<1x1x2x32xf32> to vector<2x32xf32>
    %172 = vector.shape_cast %150 : vector<2x32xf32> to vector<1x1x2x32xf32>
    tpu.vector_store %arg13[%c4, %c0_85, %c0_86, %c0_87], %172 {strides = array<i32>} : memref<8x3x2x32xf32, #tpu.memory_space<vmem>>, vector<1x1x2x32xf32>,
    %c4_88 = arith.constant 4 : index
    %c1_89 = arith.constant 1 : index
    %c0_90 = arith.constant 0 : index
    %c0_91 = arith.constant 0 : index
    %173 = vector.load %arg13[%c4_88, %c1_89, %c0_90, %c0_91] : memref<8x3x2x32xf32, #tpu.memory_space<vmem>>, vector<1x1x2x32xf32>
    %174 = vector.shape_cast %173 : vector<1x1x2x32xf32> to vector<2x32xf32>
    %175 = vector.shape_cast %156 : vector<2x32xf32> to vector<1x1x2x32xf32>
    tpu.vector_store %arg13[%c4_88, %c1_89, %c0_90, %c0_91], %175 {strides = array<i32>} : memref<8x3x2x32xf32, #tpu.memory_space<vmem>>, vector<1x1x2x32xf32>,
    %c4_92 = arith.constant 4 : index
    %c2_93 = arith.constant 2 : index
    %c0_94 = arith.constant 0 : index
    %c0_95 = arith.constant 0 : index
    %176 = vector.load %arg13[%c4_92, %c2_93, %c0_94, %c0_95] : memref<8x3x2x32xf32, #tpu.memory_space<vmem>>, vector<1x1x2x32xf32>
    %177 = vector.shape_cast %176 : vector<1x1x2x32xf32> to vector<2x32xf32>
    %178 = vector.shape_cast %162 : vector<2x32xf32> to vector<1x1x2x32xf32>
    tpu.vector_store %arg13[%c4_92, %c2_93, %c0_94, %c0_95], %178 {strides = array<i32>} : memref<8x3x2x32xf32, #tpu.memory_space<vmem>>, vector<1x1x2x32xf32>,
    %179 = vector.extract_strided_slice %9 {offsets = [10, 0], sizes = [2, 32], strides = [1, 1]} : vector<16x32xf32> to vector<2x32xf32>
    %180 = vector.broadcast %10 : vector<1x32xf32> to vector<2x32xf32>
    %181 = arith.mulf %180, %150 : vector<2x32xf32>
    %182 = arith.addf %181, %179 : vector<2x32xf32>
    %183 = vector.broadcast %11 : vector<1x32xf32> to vector<2x32xf32>
    %184 = arith.mulf %183, %156 : vector<2x32xf32>
    %cst_96 = arith.constant 1.000000e+00 : f32
    %185 = vector.broadcast %cst_96 : f32 to vector<2x32xf32>
    %186 = arith.subf %185, %162 : vector<2x32xf32>
    %187 = arith.mulf %184, %186 : vector<2x32xf32>
    %188 = arith.addf %187, %182 : vector<2x32xf32>
    %189 = vector.broadcast %12 : vector<1x32xf32> to vector<2x32xf32>
    %190 = arith.subf %188, %189 : vector<2x32xf32>
    %cst_97 = arith.constant 0.000000e+00 : f32
    %191 = vector.broadcast %cst_97 : f32 to vector<2x32xf32>
    %192 = arith.cmpf ogt, %190, %191 : vector<2x32xf32>
    %193 = arith.extui %192 : vector<2x32xi1> to vector<2x32xi32>
    %194 = arith.sitofp %193 : vector<2x32xi32> to vector<2x32xf32>
    %195 = vector.broadcast %14 : vector<1x1xf32> to vector<2x1xf32>
    %196 = arith.mulf %195, %169 : vector<2x1xf32>
    %197 = vector.broadcast %13 : vector<1x32xf32> to vector<2x32xf32>
    %198 = arith.mulf %194, %197 : vector<2x32xf32>
    %cst_98 = arith.constant dense<0.000000e+00> : vector<2xf32>
    %199 = vector.multi_reduction <add>, %198, %cst_98 [1] : vector<2x32xf32> to vector<2xf32>
    %200 = vector.shape_cast %199 : vector<2xf32> to vector<2x1xf32>
    %201 = arith.addf %196, %200 : vector<2x1xf32>
    %c5 = arith.constant 5 : index
    %c0_99 = arith.constant 0 : index
    %c0_100 = arith.constant 0 : index
    %c0_101 = arith.constant 0 : index
    %202 = vector.load %arg13[%c5, %c0_99, %c0_100, %c0_101] : memref<8x3x2x32xf32, #tpu.memory_space<vmem>>, vector<1x1x2x32xf32>
    %203 = vector.shape_cast %202 : vector<1x1x2x32xf32> to vector<2x32xf32>
    %204 = vector.shape_cast %182 : vector<2x32xf32> to vector<1x1x2x32xf32>
    tpu.vector_store %arg13[%c5, %c0_99, %c0_100, %c0_101], %204 {strides = array<i32>} : memref<8x3x2x32xf32, #tpu.memory_space<vmem>>, vector<1x1x2x32xf32>,
    %c5_102 = arith.constant 5 : index
    %c1_103 = arith.constant 1 : index
    %c0_104 = arith.constant 0 : index
    %c0_105 = arith.constant 0 : index
    %205 = vector.load %arg13[%c5_102, %c1_103, %c0_104, %c0_105] : memref<8x3x2x32xf32, #tpu.memory_space<vmem>>, vector<1x1x2x32xf32>
    %206 = vector.shape_cast %205 : vector<1x1x2x32xf32> to vector<2x32xf32>
    %207 = vector.shape_cast %188 : vector<2x32xf32> to vector<1x1x2x32xf32>
    tpu.vector_store %arg13[%c5_102, %c1_103, %c0_104, %c0_105], %207 {strides = array<i32>} : memref<8x3x2x32xf32, #tpu.memory_space<vmem>>, vector<1x1x2x32xf32>,
    %c5_106 = arith.constant 5 : index
    %c2_107 = arith.constant 2 : index
    %c0_108 = arith.constant 0 : index
    %c0_109 = arith.constant 0 : index
    %208 = vector.load %arg13[%c5_106, %c2_107, %c0_108, %c0_109] : memref<8x3x2x32xf32, #tpu.memory_space<vmem>>, vector<1x1x2x32xf32>
    %209 = vector.shape_cast %208 : vector<1x1x2x32xf32> to vector<2x32xf32>
    %210 = vector.shape_cast %194 : vector<2x32xf32> to vector<1x1x2x32xf32>
    tpu.vector_store %arg13[%c5_106, %c2_107, %c0_108, %c0_109], %210 {strides = array<i32>} : memref<8x3x2x32xf32, #tpu.memory_space<vmem>>, vector<1x1x2x32xf32>,
    %211 = vector.extract_strided_slice %9 {offsets = [12, 0], sizes = [2, 32], strides = [1, 1]} : vector<16x32xf32> to vector<2x32xf32>
    %212 = vector.broadcast %10 : vector<1x32xf32> to vector<2x32xf32>
    %213 = arith.mulf %212, %182 : vector<2x32xf32>
    %214 = arith.addf %213, %211 : vector<2x32xf32>
    %215 = vector.broadcast %11 : vector<1x32xf32> to vector<2x32xf32>
    %216 = arith.mulf %215, %188 : vector<2x32xf32>
    %cst_110 = arith.constant 1.000000e+00 : f32
    %217 = vector.broadcast %cst_110 : f32 to vector<2x32xf32>
    %218 = arith.subf %217, %194 : vector<2x32xf32>
    %219 = arith.mulf %216, %218 : vector<2x32xf32>
    %220 = arith.addf %219, %214 : vector<2x32xf32>
    %221 = vector.broadcast %12 : vector<1x32xf32> to vector<2x32xf32>
    %222 = arith.subf %220, %221 : vector<2x32xf32>
    %cst_111 = arith.constant 0.000000e+00 : f32
    %223 = vector.broadcast %cst_111 : f32 to vector<2x32xf32>
    %224 = arith.cmpf ogt, %222, %223 : vector<2x32xf32>
    %225 = arith.extui %224 : vector<2x32xi1> to vector<2x32xi32>
    %226 = arith.sitofp %225 : vector<2x32xi32> to vector<2x32xf32>
    %227 = vector.broadcast %14 : vector<1x1xf32> to vector<2x1xf32>
    %228 = arith.mulf %227, %201 : vector<2x1xf32>
    %229 = vector.broadcast %13 : vector<1x32xf32> to vector<2x32xf32>
    %230 = arith.mulf %226, %229 : vector<2x32xf32>
    %cst_112 = arith.constant dense<0.000000e+00> : vector<2xf32>
    %231 = vector.multi_reduction <add>, %230, %cst_112 [1] : vector<2x32xf32> to vector<2xf32>
    %232 = vector.shape_cast %231 : vector<2xf32> to vector<2x1xf32>
    %233 = arith.addf %228, %232 : vector<2x1xf32>
    %c6 = arith.constant 6 : index
    %c0_113 = arith.constant 0 : index
    %c0_114 = arith.constant 0 : index
    %c0_115 = arith.constant 0 : index
    %234 = vector.load %arg13[%c6, %c0_113, %c0_114, %c0_115] : memref<8x3x2x32xf32, #tpu.memory_space<vmem>>, vector<1x1x2x32xf32>
    %235 = vector.shape_cast %234 : vector<1x1x2x32xf32> to vector<2x32xf32>
    %236 = vector.shape_cast %214 : vector<2x32xf32> to vector<1x1x2x32xf32>
    tpu.vector_store %arg13[%c6, %c0_113, %c0_114, %c0_115], %236 {strides = array<i32>} : memref<8x3x2x32xf32, #tpu.memory_space<vmem>>, vector<1x1x2x32xf32>,
    %c6_116 = arith.constant 6 : index
    %c1_117 = arith.constant 1 : index
    %c0_118 = arith.constant 0 : index
    %c0_119 = arith.constant 0 : index
    %237 = vector.load %arg13[%c6_116, %c1_117, %c0_118, %c0_119] : memref<8x3x2x32xf32, #tpu.memory_space<vmem>>, vector<1x1x2x32xf32>
    %238 = vector.shape_cast %237 : vector<1x1x2x32xf32> to vector<2x32xf32>
    %239 = vector.shape_cast %220 : vector<2x32xf32> to vector<1x1x2x32xf32>
    tpu.vector_store %arg13[%c6_116, %c1_117, %c0_118, %c0_119], %239 {strides = array<i32>} : memref<8x3x2x32xf32, #tpu.memory_space<vmem>>, vector<1x1x2x32xf32>,
    %c6_120 = arith.constant 6 : index
    %c2_121 = arith.constant 2 : index
    %c0_122 = arith.constant 0 : index
    %c0_123 = arith.constant 0 : index
    %240 = vector.load %arg13[%c6_120, %c2_121, %c0_122, %c0_123] : memref<8x3x2x32xf32, #tpu.memory_space<vmem>>, vector<1x1x2x32xf32>
    %241 = vector.shape_cast %240 : vector<1x1x2x32xf32> to vector<2x32xf32>
    %242 = vector.shape_cast %226 : vector<2x32xf32> to vector<1x1x2x32xf32>
    tpu.vector_store %arg13[%c6_120, %c2_121, %c0_122, %c0_123], %242 {strides = array<i32>} : memref<8x3x2x32xf32, #tpu.memory_space<vmem>>, vector<1x1x2x32xf32>,
    %243 = vector.extract_strided_slice %9 {offsets = [14, 0], sizes = [2, 32], strides = [1, 1]} : vector<16x32xf32> to vector<2x32xf32>
    %244 = vector.broadcast %10 : vector<1x32xf32> to vector<2x32xf32>
    %245 = arith.mulf %244, %214 : vector<2x32xf32>
    %246 = arith.addf %245, %243 : vector<2x32xf32>
    %247 = vector.broadcast %11 : vector<1x32xf32> to vector<2x32xf32>
    %248 = arith.mulf %247, %220 : vector<2x32xf32>
    %cst_124 = arith.constant 1.000000e+00 : f32
    %249 = vector.broadcast %cst_124 : f32 to vector<2x32xf32>
    %250 = arith.subf %249, %226 : vector<2x32xf32>
    %251 = arith.mulf %248, %250 : vector<2x32xf32>
    %252 = arith.addf %251, %246 : vector<2x32xf32>
    %253 = vector.broadcast %12 : vector<1x32xf32> to vector<2x32xf32>
    %254 = arith.subf %252, %253 : vector<2x32xf32>
    %cst_125 = arith.constant 0.000000e+00 : f32
    %255 = vector.broadcast %cst_125 : f32 to vector<2x32xf32>
    %256 = arith.cmpf ogt, %254, %255 : vector<2x32xf32>
    %257 = arith.extui %256 : vector<2x32xi1> to vector<2x32xi32>
    %258 = arith.sitofp %257 : vector<2x32xi32> to vector<2x32xf32>
    %259 = vector.broadcast %14 : vector<1x1xf32> to vector<2x1xf32>
    %260 = arith.mulf %259, %233 : vector<2x1xf32>
    %261 = vector.broadcast %13 : vector<1x32xf32> to vector<2x32xf32>
    %262 = arith.mulf %258, %261 : vector<2x32xf32>
    %cst_126 = arith.constant dense<0.000000e+00> : vector<2xf32>
    %263 = vector.multi_reduction <add>, %262, %cst_126 [1] : vector<2x32xf32> to vector<2xf32>
    %264 = vector.shape_cast %263 : vector<2xf32> to vector<2x1xf32>
    %265 = arith.addf %260, %264 : vector<2x1xf32>
    %c7 = arith.constant 7 : index
    %c0_127 = arith.constant 0 : index
    %c0_128 = arith.constant 0 : index
    %c0_129 = arith.constant 0 : index
    %266 = vector.load %arg13[%c7, %c0_127, %c0_128, %c0_129] : memref<8x3x2x32xf32, #tpu.memory_space<vmem>>, vector<1x1x2x32xf32>
    %267 = vector.shape_cast %266 : vector<1x1x2x32xf32> to vector<2x32xf32>
    %268 = vector.shape_cast %246 : vector<2x32xf32> to vector<1x1x2x32xf32>
    tpu.vector_store %arg13[%c7, %c0_127, %c0_128, %c0_129], %268 {strides = array<i32>} : memref<8x3x2x32xf32, #tpu.memory_space<vmem>>, vector<1x1x2x32xf32>,
    %c7_130 = arith.constant 7 : index
    %c1_131 = arith.constant 1 : index
    %c0_132 = arith.constant 0 : index
    %c0_133 = arith.constant 0 : index
    %269 = vector.load %arg13[%c7_130, %c1_131, %c0_132, %c0_133] : memref<8x3x2x32xf32, #tpu.memory_space<vmem>>, vector<1x1x2x32xf32>
    %270 = vector.shape_cast %269 : vector<1x1x2x32xf32> to vector<2x32xf32>
    %271 = vector.shape_cast %252 : vector<2x32xf32> to vector<1x1x2x32xf32>
    tpu.vector_store %arg13[%c7_130, %c1_131, %c0_132, %c0_133], %271 {strides = array<i32>} : memref<8x3x2x32xf32, #tpu.memory_space<vmem>>, vector<1x1x2x32xf32>,
    %c7_134 = arith.constant 7 : index
    %c2_135 = arith.constant 2 : index
    %c0_136 = arith.constant 0 : index
    %c0_137 = arith.constant 0 : index
    %272 = vector.load %arg13[%c7_134, %c2_135, %c0_136, %c0_137] : memref<8x3x2x32xf32, #tpu.memory_space<vmem>>, vector<1x1x2x32xf32>
    %273 = vector.shape_cast %272 : vector<1x1x2x32xf32> to vector<2x32xf32>
    %274 = vector.shape_cast %258 : vector<2x32xf32> to vector<1x1x2x32xf32>
    tpu.vector_store %arg13[%c7_134, %c2_135, %c0_136, %c0_137], %274 {strides = array<i32>} : memref<8x3x2x32xf32, #tpu.memory_space<vmem>>, vector<1x1x2x32xf32>,
    %275 = tpu.concatenate %41, %73, %105, %137, %169, %201, %233, %265 in 1 : vector<2x1xf32>, vector<2x1xf32>, vector<2x1xf32>, vector<2x1xf32>, vector<2x1xf32>, vector<2x1xf32>, vector<2x1xf32>, vector<2x1xf32> -> vector<2x8xf32>
    %c0_138 = arith.constant 0 : index
    %c0_139 = arith.constant 0 : index
    %c0_140 = arith.constant 0 : index
    %276 = vector.load %arg14[%c0_138, %c0_139, %c0_140] : memref<1x2x8xf32, #tpu.memory_space<vmem>>, vector<1x2x8xf32>
    %277 = vector.shape_cast %276 : vector<1x2x8xf32> to vector<2x8xf32>
    %278 = vector.shape_cast %275 : vector<2x8xf32> to vector<1x2x8xf32>
    tpu.vector_store %arg14[%c0_138, %c0_139, %c0_140], %278 {strides = array<i32>} : memref<1x2x8xf32, #tpu.memory_space<vmem>>, vector<1x2x8xf32>,
    %c0_141 = arith.constant 0 : index
    %c0_142 = arith.constant 0 : index
    %279 = vector.load %arg15[%c0_141, %c0_142] : memref<2x32xf32, #tpu.memory_space<vmem>>, vector<2x32xf32>
    tpu.vector_store %arg15[%c0_141, %c0_142], %246 {strides = array<i32>} : memref<2x32xf32, #tpu.memory_space<vmem>>, vector<2x32xf32>,
    %c0_143 = arith.constant 0 : index
    %c0_144 = arith.constant 0 : index
    %280 = vector.load %arg16[%c0_143, %c0_144] : memref<2x32xf32, #tpu.memory_space<vmem>>, vector<2x32xf32>
    tpu.vector_store %arg16[%c0_143, %c0_144], %252 {strides = array<i32>} : memref<2x32xf32, #tpu.memory_space<vmem>>, vector<2x32xf32>,
    %c0_145 = arith.constant 0 : index
    %c0_146 = arith.constant 0 : index
    %281 = vector.load %arg17[%c0_145, %c0_146] : memref<2x32xf32, #tpu.memory_space<vmem>>, vector<2x32xf32>
    tpu.vector_store %arg17[%c0_145, %c0_146], %258 {strides = array<i32>} : memref<2x32xf32, #tpu.memory_space<vmem>>, vector<2x32xf32>,
    %c0_147 = arith.constant 0 : index
    %c0_148 = arith.constant 0 : index
    %282 = vector.load %arg18[%c0_147, %c0_148] : memref<2x1xf32, #tpu.memory_space<vmem>>, vector<2x1xf32>
    tpu.vector_store %arg18[%c0_147, %c0_148], %265 {strides = array<i32>} : memref<2x1xf32, #tpu.memory_space<vmem>>, vector<2x1xf32>,
    return
  }
  func.func @transform_0(%arg0: i32) -> (i32, i32, i32) {
    %c0_i32 = arith.constant 0 : i32
    %c0_i32_0 = arith.constant 0 : i32
    %c0_i32_1 = arith.constant 0 : i32
    return %arg0, %c0_i32, %c0_i32_0 : i32, i32, i32
  }
  func.func @transform_1(%arg0: i32) -> (i32, i32) {
    %c0_i32 = arith.constant 0 : i32
    %c0_i32_0 = arith.constant 0 : i32
    %c0_i32_1 = arith.constant 0 : i32
    return %c0_i32, %c0_i32_0 : i32, i32
  }
  func.func @transform_2(%arg0: i32) -> (i32, i32) {
    %c0_i32 = arith.constant 0 : i32
    %c0_i32_0 = arith.constant 0 : i32
    %c0_i32_1 = arith.constant 0 : i32
    return %c0_i32, %c0_i32_0 : i32, i32
  }
  func.func @transform_3(%arg0: i32) -> (i32, i32) {
    %c0_i32 = arith.constant 0 : i32
    %c0_i32_0 = arith.constant 0 : i32
    %c0_i32_1 = arith.constant 0 : i32
    return %c0_i32, %c0_i32_0 : i32, i32
  }
  func.func @transform_4(%arg0: i32) -> (i32, i32) {
    %c0_i32 = arith.constant 0 : i32
    %c0_i32_0 = arith.constant 0 : i32
    %c0_i32_1 = arith.constant 0 : i32
    return %c0_i32, %c0_i32_0 : i32, i32
  }
  func.func @transform_5(%arg0: i32) -> (i32, i32) {
    %c0_i32 = arith.constant 0 : i32
    %c0_i32_0 = arith.constant 0 : i32
    %c0_i32_1 = arith.constant 0 : i32
    return %c0_i32, %c0_i32_0 : i32, i32
  }
  func.func @transform_6(%arg0: i32) -> (i32, i32) {
    %c0_i32 = arith.constant 0 : i32
    %c0_i32_0 = arith.constant 0 : i32
    %c0_i32_1 = arith.constant 0 : i32
    return %c0_i32, %c0_i32_0 : i32, i32
  }
  func.func @transform_7(%arg0: i32) -> (i32, i32) {
    %c0_i32 = arith.constant 0 : i32
    %c0_i32_0 = arith.constant 0 : i32
    %c0_i32_1 = arith.constant 0 : i32
    return %c0_i32, %c0_i32_0 : i32, i32
  }
  func.func @transform_8(%arg0: i32) -> (i32, i32) {
    %c0_i32 = arith.constant 0 : i32
    %c0_i32_0 = arith.constant 0 : i32
    %c0_i32_1 = arith.constant 0 : i32
    return %c0_i32, %c0_i32_0 : i32, i32
  }
  func.func @transform_9(%arg0: i32) -> (i32, i32) {
    %c0_i32 = arith.constant 0 : i32
    %c0_i32_0 = arith.constant 0 : i32
    %c0_i32_1 = arith.constant 0 : i32
    return %c0_i32, %c0_i32_0 : i32, i32
  }
  func.func @transform_10(%arg0: i32) -> (i32, i32) {
    %c0_i32 = arith.constant 0 : i32
    %c0_i32_0 = arith.constant 0 : i32
    %c0_i32_1 = arith.constant 0 : i32
    return %c0_i32, %c0_i32_0 : i32, i32
  }
  func.func @transform_11(%arg0: i32) -> (i32, i32) {
    %c0_i32 = arith.constant 0 : i32
    %c0_i32_0 = arith.constant 0 : i32
    %c0_i32_1 = arith.constant 0 : i32
    return %c0_i32, %c0_i32_0 : i32, i32
  }
  func.func @transform_12(%arg0: i32) -> (i32, i32, i32, i32) {
    %c0_i32 = arith.constant 0 : i32
    %c0_i32_0 = arith.constant 0 : i32
    %c0_i32_1 = arith.constant 0 : i32
    %c0_i32_2 = arith.constant 0 : i32
    return %arg0, %c0_i32, %c0_i32_0, %c0_i32_1 : i32, i32, i32, i32
  }
  func.func @transform_13(%arg0: i32) -> (i32, i32, i32) {
    %c0_i32 = arith.constant 0 : i32
    %c0_i32_0 = arith.constant 0 : i32
    %c0_i32_1 = arith.constant 0 : i32
    return %arg0, %c0_i32, %c0_i32_0 : i32, i32, i32
  }
}

</mosaic_0001>

<llo_original>
// kernel: tpu_custom_call.1
$region0: #{tpu_custom_call.1}
  #allocation0 [shape = 'u32[]', space=smem, size = 0x4, offset = 0x4, fixed_abs, tag = 'smem constant byte address 0x4 - core index']
  #allocation1 [shape = 'u32[72,128]{1,0:T(1,128)}', space=vmem, size = 0x9000, scoped, tag = 'internal scratch']
  #allocation2 [shape = 'f32[2,32]{1,0:T(2,128)}', space=vmem, size = 0x400, scoped, tag = 'scratch operand']
  #allocation3 [shape = 'f32[2,32]{1,0:T(2,128)}', space=vmem, size = 0x400, scoped, tag = 'scratch operand']
  #allocation4 [shape = 'f32[2,32]{1,0:T(2,128)}', space=vmem, size = 0x400, scoped, tag = 'scratch operand']
  #allocation5 [shape = 'f32[2,1]{1,0:T(2,128)}', space=vmem, size = 0x400, scoped, tag = 'scratch operand']
  #allocation6 [shape = 'f32[1,1]{1,0:T(1,128)S(1)}', space=vmem, size = 0x200, scoped, tag = 'scoped memory for tpu_custom_call.1']
  %s0 = inlined_call_operand.hbm [shape: f32[1,16,16], index: 0, kind: input, shape index: {}]
  %s1 = inlined_call_operand.hbm [shape: f32[16,32], index: 1, kind: input, shape index: {}]
  %s2 = inlined_call_operand.hbm [shape: f32[1,32], index: 2, kind: input, shape index: {}]
  %s3 = inlined_call_operand.hbm [shape: f32[1,32], index: 3, kind: input, shape index: {}]
  %s4 = inlined_call_operand.vmem [shape: f32[1,32], index: 4, kind: input, shape index: {}]
  %s5 = inlined_call_operand.vmem [shape: f32[1,32], index: 5, kind: input, shape index: {}]
  %s6 = inlined_call_operand.vmem [shape: f32[1,32], index: 6, kind: input, shape index: {}]
  %s7 = inlined_call_operand.<no memory space> [shape: f32[1,1], index: 7, kind: input, shape index: {}]
  %s8 = inlined_call_operand.vmem [shape: f32[2,32], index: 8, kind: input, shape index: {}]
  %s9 = inlined_call_operand.vmem [shape: f32[2,32], index: 9, kind: input, shape index: {}]
  %s10 = inlined_call_operand.vmem [shape: f32[2,32], index: 10, kind: input, shape index: {}]
  %s11 = inlined_call_operand.vmem [shape: f32[2,1], index: 11, kind: input, shape index: {}]
  %s12 = inlined_call_operand.hbm [shape: f32[8,3,2,32], index: 12, kind: output, shape index: {0}]
  %s13 = inlined_call_operand.hbm [shape: f32[1,2,8], index: 13, kind: output, shape index: {1}]
  %14 = xla_tuple %s12, %s13
  %s15 = sld [smem:[#allocation0]]
  $region86: #{tpu_custom_call.1} parent=0
    _
  %s17 = ssub.s32 1, %s15
  %s18 = scalar_select 0, %s17, %s15
  %v19 = vstv %s7
  %20 = vst [vmem:[#allocation6] sm:$0x1] %v19
  $region1: #{tpu_custom_call.1} parent=0
    #allocation7 [shape = 'u8[8192]{0}', space=vmem, size = 0x2000, scoped, tag = 'input window, operand 0, single buffered']
    #allocation8 [shape = 's32[1]{0}', space=sflag, size = 0x4, scoped, tag = 'scoped memory for tpu_custom_call.1']
    #allocation9 [shape = 's32[1]{0}', space=sflag, size = 0x4, scoped, tag = 'scoped memory for tpu_custom_call.1']
    #allocation10 [shape = 'u8[8192]{0}', space=vmem, size = 0x2000, scoped, tag = 'input window, operand 1, single buffered']
    #allocation11 [shape = 's32[1]{0}', space=sflag, size = 0x4, scoped, tag = 'scoped memory for tpu_custom_call.1']
    #allocation12 [shape = 'u8[512]{0}', space=vmem, size = 0x400, scoped, tag = 'input window, operand 2, single buffered']
    #allocation13 [shape = 'u8[512]{0}', space=vmem, size = 0x400, scoped, tag = 'input window, operand 3, single buffered']
    #allocation14 [shape = 's32[1]{0}', space=sflag, size = 0x4, scoped, tag = 'scoped memory for tpu_custom_call.1']
    #allocation15 [shape = 'u8[24576]{0}', space=vmem, size = 0x6000, scoped, tag = 'output window, operand 0, single buffered']
    #allocation16 [shape = 'u8[1024]{0}', space=vmem, size = 0x400, scoped, tag = 'output window, operand 1, single buffered']
    #allocation17 [shape = 's32[1]{0}', space=sflag, size = 0x4, scoped, tag = 'scoped memory for tpu_custom_call.1']
    %21 = vsyncpa [#allocation8], 0
    %22 = vsyncpa [#allocation11], 0
    %23 = vsyncpa [#allocation14], 0
    %24 = vsyncpa [#allocation9], 0
    %25 = vsyncpa [#allocation17], 0
    // Predicated region
    $region2: #{tpu_custom_call.1} parent=1 // pred_check
      _
    $region3: #{tpu_custom_call.1} parent=1 // pred_check_branch
      %27 = sbr.rel (0) target = $region5
    $region4: #{tpu_custom_call.1} parent=1 // pred_region
      %29 = vsyncadd [#allocation8], 0
      %s30 = sshll.u32 %s0, 4
      %s31 = int_to_ptr.hbm [resolvable:$true] %s30
      %s32 = sshll.u32 [#allocation7], 4
      %s33 = int_to_ptr.vmem [resolvable:$true] %s32
      %38 = dma.hbm_to_vmem [thread:$0]  %s31, 256, %s33, [#allocation8], 128, 128, 8
    $region5: #{tpu_custom_call.1} parent=1 // pred_fallthru
      _
    // Predicated region
    $region6: #{tpu_custom_call.1} parent=1 // pred_check
      _
    $region7: #{tpu_custom_call.1} parent=1 // pred_check_branch
      %40 = sbr.rel (0) target = $region9
    $region8: #{tpu_custom_call.1} parent=1 // pred_region
      %42 = vsyncadd [#allocation11], 0
      %s43 = sshll.u32 %s1, 4
      %s44 = int_to_ptr.hbm [resolvable:$true] %s43
      %s45 = sshll.u32 [#allocation10], 4
      %s46 = int_to_ptr.vmem [resolvable:$true] %s45
      %51 = dma.hbm_to_vmem [thread:$0]  %s44, 256, %s46, [#allocation11], 128, 128, 8
    $region9: #{tpu_custom_call.1} parent=1 // pred_fallthru
      _
    // Predicated region
    $region10: #{tpu_custom_call.1} parent=1 // pred_check
      _
    $region11: #{tpu_custom_call.1} parent=1 // pred_check_branch
      %53 = sbr.rel (0) target = $region13
    $region12: #{tpu_custom_call.1} parent=1 // pred_region
      %55 = vsyncadd [#allocation11], 0
      %s57 = sshll.u32 %s2, 4
      %s58 = int_to_ptr.hbm [resolvable:$true] %s57
      %s59 = sshll.u32 [#allocation12], 4
      %s60 = int_to_ptr.vmem [resolvable:$true] %s59
      %62 = dma.hbm_to_vmem [thread:$0]  %s58, 16, %s60, [#allocation11]
    $region13: #{tpu_custom_call.1} parent=1 // pred_fallthru
      _
    // Predicated region
    $region14: #{tpu_custom_call.1} parent=1 // pred_check
      _
    $region15: #{tpu_custom_call.1} parent=1 // pred_check_branch
      %64 = sbr.rel (0) target = $region17
    $region16: #{tpu_custom_call.1} parent=1 // pred_region
      %66 = vsyncadd [#allocation14], 0
      %s68 = sshll.u32 %s3, 4
      %s69 = int_to_ptr.hbm [resolvable:$true] %s68
      %s70 = sshll.u32 [#allocation13], 4
      %s71 = int_to_ptr.vmem [resolvable:$true] %s70
      %73 = dma.hbm_to_vmem [thread:$0]  %s69, 16, %s71, [#allocation14]
    $region17: #{tpu_custom_call.1} parent=1 // pred_fallthru
      _
    // Predicated region
    $region18: #{tpu_custom_call.1} parent=1 // pred_check
      _
    $region19: #{tpu_custom_call.1} parent=1 // pred_check_branch
      %75 = sbr.rel (0) target = $region21
    $region20: #{tpu_custom_call.1} parent=1 // pred_region
      _
    $region21: #{tpu_custom_call.1} parent=1 // pred_fallthru
      _
    // Predicated region
    $region22: #{tpu_custom_call.1} parent=1 // pred_check
      _
    $region23: #{tpu_custom_call.1} parent=1 // pred_check_branch
      %77 = sbr.rel (0) target = $region25
    $region24: #{tpu_custom_call.1} parent=1 // pred_region
      _
    $region25: #{tpu_custom_call.1} parent=1 // pred_fallthru
      _
    // Predicated region
    $region26: #{tpu_custom_call.1} parent=1 // pred_check
      _
    $region27: #{tpu_custom_call.1} parent=1 // pred_check_branch
      %79 = sbr.rel (0) target = $region29
    $region28: #{tpu_custom_call.1} parent=1 // pred_region
      _
    $region29: #{tpu_custom_call.1} parent=1 // pred_fallthru
      _
    // Predicated region
    $region30: #{tpu_custom_call.1} parent=1 // pred_check
      _
    $region31: #{tpu_custom_call.1} parent=1 // pred_check_branch
      %81 = sbr.rel (0) target = $region33
    $region32: #{tpu_custom_call.1} parent=1 // pred_region
      _
    $region33: #{tpu_custom_call.1} parent=1 // pred_fallthru
      _
    // Predicated region
    $region34: #{tpu_custom_call.1} parent=1 // pred_check
      _
    $region35: #{tpu_custom_call.1} parent=1 // pred_check_branch
      %83 = sbr.rel (0) target = $region37
    $region36: #{tpu_custom_call.1} parent=1 // pred_region
      _
    $region37: #{tpu_custom_call.1} parent=1 // pred_fallthru
      _
    // Predicated region
    $region38: #{tpu_custom_call.1} parent=1 // pred_check
      _
    $region39: #{tpu_custom_call.1} parent=1 // pred_check_branch
      %85 = sbr.rel (0) target = $region41
    $region40: #{tpu_custom_call.1} parent=1 // pred_region
      _
    $region41: #{tpu_custom_call.1} parent=1 // pred_fallthru
      _
    // Predicated region
    $region42: #{tpu_custom_call.1} parent=1 // pred_check
      _
    $region43: #{tpu_custom_call.1} parent=1 // pred_check_branch
      %87 = sbr.rel (0) target = $region45
    $region44: #{tpu_custom_call.1} parent=1 // pred_region
      _
    $region45: #{tpu_custom_call.1} parent=1 // pred_fallthru
      _
    // Predicated region
    $region46: #{tpu_custom_call.1} parent=1 // pred_check
      _
    $region47: #{tpu_custom_call.1} parent=1 // pred_check_branch
      %89 = sbr.rel (0) target = $region49
    $region48: #{tpu_custom_call.1} parent=1 // pred_region
      _
    $region49: #{tpu_custom_call.1} parent=1 // pred_fallthru
      _
    // Predicated region
    $region50: #{tpu_custom_call.1} parent=1 // pred_check
      _
    $region51: #{tpu_custom_call.1} parent=1 // pred_check_branch
      %91 = sbr.rel (0) target = $region53
    $region52: #{tpu_custom_call.1} parent=1 // pred_region
      %93 = dma.done [#allocation8], 256
    $region53: #{tpu_custom_call.1} parent=1 // pred_fallthru
      _
    // Predicated region
    $region54: #{tpu_custom_call.1} parent=1 // pred_check
      _
    $region55: #{tpu_custom_call.1} parent=1 // pred_check_branch
      %95 = sbr.rel (0) target = $region57
    $region56: #{tpu_custom_call.1} parent=1 // pred_region
      %97 = dma.done [#allocation11], 256
    $region57: #{tpu_custom_call.1} parent=1 // pred_fallthru
      _
    // Predicated region
    $region58: #{tpu_custom_call.1} parent=1 // pred_check
      _
    $region59: #{tpu_custom_call.1} parent=1 // pred_check_branch
      %99 = sbr.rel (0) target = $region61
    $region60: #{tpu_custom_call.1} parent=1 // pred_region
      %101 = dma.done [#allocation11], 16
    $region61: #{tpu_custom_call.1} parent=1 // pred_fallthru
      _
    // Predicated region
    $region62: #{tpu_custom_call.1} parent=1 // pred_check
      _
    $region63: #{tpu_custom_call.1} parent=1 // pred_check_branch
      %103 = sbr.rel (0) target = $region65
    $region64: #{tpu_custom_call.1} parent=1 // pred_region
      %105 = dma.done [#allocation14], 16
    $region65: #{tpu_custom_call.1} parent=1 // pred_fallthru
      _
    %p106 = scmp.eq.s32.totalorder 0, 0
    // Predicated region
    $region66: #{tpu_custom_call.1} parent=1 // pred_check
      %p107 = pneg %p106
    $region67: #{tpu_custom_call.1} parent=1 // pred_check_branch
      %109 = sbr.rel (%p107) target = $region69
    $region68: #{tpu_custom_call.1} parent=1 // pred_region
      %v110 = vld [vmem:[%s8] sm:$0x3]
      %vm111 = vcmask 254976
      %112 = vst.msk [vmem:[#allocation2] sm:$0x3] %vm111, %v110
      %v113 = vld [vmem:[%s9] sm:$0x3]
      %114 = vst.msk [vmem:[#allocation3] sm:$0x3] %vm111, %v113
      %v115 = vld [vmem:[%s10] sm:$0x3]
      %116 = vst.msk [vmem:[#allocation4] sm:$0x3] %vm111, %v115
      %v117 = vld [vmem:[%s11] sm:$0x3]
      %vm118 = vcmask 1024
      %119 = vst.msk [vmem:[#allocation5] sm:$0x3] %vm118, %v117
    $region69: #{tpu_custom_call.1} parent=1 // pred_fallthru
      _
    %v120 = vld [vmem:[#allocation7] sm:$0xff]
    %v121 = vld [vmem:[#allocation7 + $0x8] sm:$0xff]
    %v122 = vld [vmem:[#allocation10] sm:$0xff]
    %v123 = vld [vmem:[#allocation10 + $0x8] sm:$0xff]
    %v124 = vld [vmem:[#allocation12] sm:$0x1]
    %v126 = vperm.slane %v124, 0
    %vm128 = vcmask 130048
    %v130 = vsel %vm128, %v120, 0
    %v133 = vsel %vm128, %v121, 0
    %135 = vmatpush.msra.mxu0 0.0
    %136 = vmatpush.msra.mxu0 0.0
    %137 = vmatpush.msra.mxu0 0.0
    %138 = vmatpush.msra.mxu0 0.0
    %139 = vmatpush.msra.mxu0 0.0
    %140 = vmatpush.msra.mxu0 0.0
    %141 = vmatpush.msra.mxu0 0.0
    %142 = vmatpush.msra.mxu0 0.0
    %143 = vmatpush.msra.mxu0 0.0
    %144 = vmatpush.msra.mxu0 0.0
    %145 = vmatpush.msra.mxu0 0.0
    %146 = vmatpush.msra.mxu0 0.0
    %147 = vmatpush.msra.mxu0 0.0
    %148 = vmatpush.msra.mxu0 0.0
    %149 = vmatpush.msra.mxu0 %v123
    %150 = vmatpush.msra.mxu0 %v122
    %151 = vmatmul.f32.gmra.mxu0 %v130
    %v152 = vpop.f32.mrf.mxu0
    %v153 = vadd.f32 %v126, %v152
    %154 = vmatmul.f32.gmra.mxu0 %v133
    %v155 = vpop.f32.mrf.mxu0
    %v156 = vadd.f32 %v126, %v155
    %157 = vdwg.mxu0
    %v158 = vld [vmem:[#allocation13] sm:$0x1]
    %v159 = vld [vmem:[%s4] sm:$0x1]
    %v160 = vld [vmem:[%s5] sm:$0x1]
    %v161 = vld [vmem:[%s6] sm:$0x1]
    %v162 = vld [vmem:[#allocation6] sm:$0x1]
    %v163 = vld [vmem:[#allocation2] sm:$0x3]
    %v164 = vld [vmem:[#allocation3] sm:$0x3]
    %v165 = vld [vmem:[#allocation4] sm:$0x3]
    %v166 = vld [vmem:[#allocation5] sm:$0x3]
    %v168 = vperm.slane %v158, 0
    %v170 = vmul.f32 %v168, %v163
    %v171 = vadd.f32 %v170, %v153
    %v173 = vperm.slane %v159, 0
    %v175 = vmul.f32 %v173, %v164
    %v176 = vsub.f32 1.0, %v165
    %v177 = vmul.f32 %v175, %v176
    %v178 = vadd.f32 %v177, %v171
    %v180 = vperm.slane %v160, 0
    %v182 = vsub.f32 %v178, %v180
    %vm183 = vcmp.gt.f32.partialorder %v182, 0.0
    %v184 = vsel %vm183, 1, 0
    %v185 = vcvt.s32.f32 %v184
    %v187 = vperm.slane %v162, 0
    %v189 = vmul.f32 %v187, %v166
    %v191 = vperm.slane %v161, 0
    %v193 = vmul.f32 %v185, %v191
    %vm194 = vcmask 254976
    %v195 = vsel %vm194, %v193, 0.0
    %196 = vadd.xlane.f32.xlu0 %v195
    %v197 = vpop.xlane.xlu0 %196
    %v198 = vadd.f32 %v189, %v197
    %199 = vst.msk [vmem:[#allocation15] sm:$0x3] %vm194, %v171
    %s200 = scalar_lea.vmem [#allocation15], 2
    %201 = vst.msk [vmem:[%s200] sm:$0x3] %vm194, %v178
    %s202 = scalar_lea.vmem [#allocation15], 4
    %203 = vst.msk [vmem:[%s202] sm:$0x3] %vm194, %v185
    %v204 = vmul.f32 %v168, %v171
    %v206 = vrot.slane %v153, 2
    %v208 = vadd.f32 %v204, %v206
    %v209 = vmul.f32 %v173, %v178
    %v210 = vsub.f32 1.0, %v185
    %v211 = vmul.f32 %v209, %v210
    %v212 = vadd.f32 %v211, %v208
    %v213 = vsub.f32 %v212, %v180
    %vm214 = vcmp.gt.f32.partialorder %v213, 0.0
    %v215 = vsel %vm214, 1, 0
    %v216 = vcvt.s32.f32 %v215
    %v217 = vmul.f32 %v187, %v198
    %v218 = vmul.f32 %v216, %v191
    %v219 = vsel %vm194, %v218, 0.0
    %220 = vadd.xlane.f32.xlu0 %v219
    %v221 = vpop.xlane.xlu0 %220
    %v222 = vadd.f32 %v217, %v221
    %s223 = scalar_lea.vmem [#allocation15], 6
    %224 = vst.msk [vmem:[%s223] sm:$0x3] %vm194, %v208
    %s225 = scalar_lea.vmem [#allocation15], 8
    %226 = vst.msk [vmem:[%s225] sm:$0x3] %vm194, %v212
    %s227 = scalar_lea.vmem [#allocation15], 10
    %228 = vst.msk [vmem:[%s227] sm:$0x3] %vm194, %v216
    %v229 = vmul.f32 %v168, %v208
    %v230 = vrot.slane %v153, 4
    %v232 = vadd.f32 %v229, %v230
    %v233 = vmul.f32 %v173, %v212
    %v234 = vsub.f32 1.0, %v216
    %v235 = vmul.f32 %v233, %v234
    %v236 = vadd.f32 %v235, %v232
    %v237 = vsub.f32 %v236, %v180
    %vm238 = vcmp.gt.f32.partialorder %v237, 0.0
    %v239 = vsel %vm238, 1, 0
    %v240 = vcvt.s32.f32 %v239
    %v241 = vmul.f32 %v187, %v222
    %v242 = vmul.f32 %v240, %v191
    %v243 = vsel %vm194, %v242, 0.0
    %244 = vadd.xlane.f32.xlu0 %v243
    %v245 = vpop.xlane.xlu0 %244
    %v246 = vadd.f32 %v241, %v245
    %s247 = scalar_lea.vmem [#allocation15], 12
    %248 = vst.msk [vmem:[%s247] sm:$0x3] %vm194, %v232
    %s249 = scalar_lea.vmem [#allocation15], 14
    %250 = vst.msk [vmem:[%s249] sm:$0x3] %vm194, %v236
    %s251 = scalar_lea.vmem [#allocation15], 16
    %252 = vst.msk [vmem:[%s251] sm:$0x3] %vm194, %v240
    %v253 = vmul.f32 %v168, %v232
    %v254 = vrot.slane %v153, 6
    %v256 = vadd.f32 %v253, %v254
    %v257 = vmul.f32 %v173, %v236
    %v258 = vsub.f32 1.0, %v240
    %v259 = vmul.f32 %v257, %v258
    %v260 = vadd.f32 %v259, %v256
    %v261 = vsub.f32 %v260, %v180
    %vm262 = vcmp.gt.f32.partialorder %v261, 0.0
    %v263 = vsel %vm262, 1, 0
    %v264 = vcvt.s32.f32 %v263
    %v265 = vmul.f32 %v187, %v246
    %v266 = vmul.f32 %v264, %v191
    %v267 = vsel %vm194, %v266, 0.0
    %268 = vadd.xlane.f32.xlu0 %v267
    %v269 = vpop.xlane.xlu0 %268
    %v270 = vadd.f32 %v265, %v269
    %s271 = scalar_lea.vmem [#allocation15], 18
    %272 = vst.msk [vmem:[%s271] sm:$0x3] %vm194, %v256
    %s273 = scalar_lea.vmem [#allocation15], 20
    %274 = vst.msk [vmem:[%s273] sm:$0x3] %vm194, %v260
    %s275 = scalar_lea.vmem [#allocation15], 22
    %276 = vst.msk [vmem:[%s275] sm:$0x3] %vm194, %v264
    %v277 = vmul.f32 %v168, %v256
    %v278 = vadd.f32 %v277, %v156
    %v279 = vmul.f32 %v173, %v260
    %v280 = vsub.f32 1.0, %v264
    %v281 = vmul.f32 %v279, %v280
    %v282 = vadd.f32 %v281, %v278
    %v283 = vsub.f32 %v282, %v180
    %vm284 = vcmp.gt.f32.partialorder %v283, 0.0
    %v285 = vsel %vm284, 1, 0
    %v286 = vcvt.s32.f32 %v285
    %v287 = vmul.f32 %v187, %v270
    %v288 = vmul.f32 %v286, %v191
    %v289 = vsel %vm194, %v288, 0.0
    %290 = vadd.xlane.f32.xlu0 %v289
    %v291 = vpop.xlane.xlu0 %290
    %v292 = vadd.f32 %v287, %v291
    %s293 = scalar_lea.vmem [#allocation15], 24
    %294 = vst.msk [vmem:[%s293] sm:$0x3] %vm194, %v278
    %s295 = scalar_lea.vmem [#allocation15], 26
    %296 = vst.msk [vmem:[%s295] sm:$0x3] %vm194, %v282
    %s297 = scalar_lea.vmem [#allocation15], 28
    %298 = vst.msk [vmem:[%s297] sm:$0x3] %vm194, %v286
    %v299 = vmul.f32 %v168, %v278
    %v301 = vrot.slane %v156, 2
    %v303 = vadd.f32 %v299, %v301
    %v304 = vmul.f32 %v173, %v282
    %v305 = vsub.f32 1.0, %v286
    %v306 = vmul.f32 %v304, %v305
    %v307 = vadd.f32 %v306, %v303
    %v308 = vsub.f32 %v307, %v180
    %vm309 = vcmp.gt.f32.partialorder %v308, 0.0
    %v310 = vsel %vm309, 1, 0
    %v311 = vcvt.s32.f32 %v310
    %v312 = vmul.f32 %v187, %v292
    %v313 = vmul.f32 %v311, %v191
    %v314 = vsel %vm194, %v313, 0.0
    %315 = vadd.xlane.f32.xlu0 %v314
    %v316 = vpop.xlane.xlu0 %315
    %v317 = vadd.f32 %v312, %v316
    %s318 = scalar_lea.vmem [#allocation15], 30
    %319 = vst.msk [vmem:[%s318] sm:$0x3] %vm194, %v303
    %s320 = scalar_lea.vmem [#allocation15], 32
    %321 = vst.msk [vmem:[%s320] sm:$0x3] %vm194, %v307
    %s322 = scalar_lea.vmem [#allocation15], 34
    %323 = vst.msk [vmem:[%s322] sm:$0x3] %vm194, %v311
    %v324 = vmul.f32 %v168, %v303
    %v325 = vrot.slane %v156, 4
    %v327 = vadd.f32 %v324, %v325
    %v328 = vmul.f32 %v173, %v307
    %v329 = vsub.f32 1.0, %v311
    %v330 = vmul.f32 %v328, %v329
    %v331 = vadd.f32 %v330, %v327
    %v332 = vsub.f32 %v331, %v180
    %vm333 = vcmp.gt.f32.partialorder %v332, 0.0
    %v334 = vsel %vm333, 1, 0
    %v335 = vcvt.s32.f32 %v334
    %v336 = vmul.f32 %v187, %v317
    %v337 = vmul.f32 %v335, %v191
    %v338 = vsel %vm194, %v337, 0.0
    %339 = vadd.xlane.f32.xlu0 %v338
    %v340 = vpop.xlane.xlu0 %339
    %v341 = vadd.f32 %v336, %v340
    %s342 = scalar_lea.vmem [#allocation15], 36
    %343 = vst.msk [vmem:[%s342] sm:$0x3] %vm194, %v327
    %s344 = scalar_lea.vmem [#allocation15], 38
    %345 = vst.msk [vmem:[%s344] sm:$0x3] %vm194, %v331
    %s346 = scalar_lea.vmem [#allocation15], 40
    %347 = vst.msk [vmem:[%s346] sm:$0x3] %vm194, %v335
    %v348 = vmul.f32 %v168, %v327
    %v349 = vrot.slane %v156, 6
    %v351 = vadd.f32 %v348, %v349
    %v352 = vmul.f32 %v173, %v331
    %v353 = vsub.f32 1.0, %v335
    %v354 = vmul.f32 %v352, %v353
    %v355 = vadd.f32 %v354, %v351
    %v356 = vsub.f32 %v355, %v180
    %vm357 = vcmp.gt.f32.partialorder %v356, 0.0
    %v358 = vsel %vm357, 1, 0
    %v359 = vcvt.s32.f32 %v358
    %v360 = vmul.f32 %v187, %v341
    %v361 = vmul.f32 %v359, %v191
    %v362 = vsel %vm194, %v361, 0.0
    %363 = vadd.xlane.f32.xlu0 %v362
    %v364 = vpop.xlane.xlu0 %363
    %v365 = vadd.f32 %v360, %v364
    %s366 = scalar_lea.vmem [#allocation15], 42
    %367 = vst.msk [vmem:[%s366] sm:$0x3] %vm194, %v351
    %s368 = scalar_lea.vmem [#allocation15], 44
    %369 = vst.msk [vmem:[%s368] sm:$0x3] %vm194, %v355
    %s370 = scalar_lea.vmem [#allocation15], 46
    %371 = vst.msk [vmem:[%s370] sm:$0x3] %vm194, %v359
    %373 = vrot.lane.b32.xlu0 %v222, 1
    %v374 = vpop.permute.xlu0 %373
    %377 = vrot.lane.b32.xlu0 %v246, 2
    %v378 = vpop.permute.xlu0 %377
    %381 = vrot.lane.b32.xlu0 %v270, 3
    %v382 = vpop.permute.xlu0 %381
    %385 = vrot.lane.b32.xlu0 %v292, 4
    %v386 = vpop.permute.xlu0 %385
    %389 = vrot.lane.b32.xlu0 %v317, 5
    %v390 = vpop.permute.xlu0 %389
    %393 = vrot.lane.b32.xlu0 %v341, 6
    %v394 = vpop.permute.xlu0 %393
    %397 = vrot.lane.b32.xlu0 %v365, 7
    %v398 = vpop.permute.xlu0 %397
    %vm400 = vcmask 7168
    %v401 = vsel %vm400, %v198, %v374
    %vm402 = vcmask 15360
    %v403 = vsel %vm402, %v401, %v378
    %vm404 = vcmask 23552
    %v405 = vsel %vm404, %v403, %v382
    %vm406 = vcmask 31744
    %v407 = vsel %vm406, %v405, %v386
    %vm408 = vcmask 39936
    %v409 = vsel %vm408, %v407, %v390
    %vm410 = vcmask 48128
    %v411 = vsel %vm410, %v409, %v394
    %vm412 = vcmask 56320
    %v413 = vsel %vm412, %v411, %v398
    %vm414 = vcmask 58368
    %415 = vst.msk [vmem:[#allocation16] sm:$0x3] %vm414, %v413
    %416 = vst.msk [vmem:[#allocation2] sm:$0x3] %vm194, %v351
    %417 = vst.msk [vmem:[#allocation3] sm:$0x3] %vm194, %v355
    %418 = vst.msk [vmem:[#allocation4] sm:$0x3] %vm194, %v359
    %vm419 = vcmask 1024
    %420 = vst.msk [vmem:[#allocation5] sm:$0x3] %vm419, %v365
    // Predicated region
    $region70: #{tpu_custom_call.1} parent=1 // pred_check
      _
    $region71: #{tpu_custom_call.1} parent=1 // pred_check_branch
      %422 = sbr.rel (0) target = $region73
    $region72: #{tpu_custom_call.1} parent=1 // pred_region
      %424 = vsyncadd [#allocation9], 0
      %s425 = sshll.u32 [#allocation15], 4
      %s426 = int_to_ptr.vmem [resolvable:$true] %s425
      %s427 = sshll.u32 %s12, 4
      %s428 = int_to_ptr.hbm [resolvable:$true] %s427
      %433 = dma.vmem_to_hbm [thread:$0]  %s426, 768, %s428, [#allocation9], 32, 32, 2
    $region73: #{tpu_custom_call.1} parent=1 // pred_fallthru
      _
    // Predicated region
    $region74: #{tpu_custom_call.1} parent=1 // pred_check
      _
    $region75: #{tpu_custom_call.1} parent=1 // pred_check_branch
      %435 = sbr.rel (0) target = $region77
    $region76: #{tpu_custom_call.1} parent=1 // pred_region
      %437 = vsyncadd [#allocation17], 0
      %s439 = sshll.u32 [#allocation16], 4
      %s440 = int_to_ptr.vmem [resolvable:$true] %s439
      %s441 = sshll.u32 %s13, 4
      %s442 = int_to_ptr.hbm [resolvable:$true] %s441
      %444 = dma.vmem_to_hbm [thread:$0]  %s440, 32, %s442, [#allocation17]
    $region77: #{tpu_custom_call.1} parent=1 // pred_fallthru
      _
    // Predicated region
    $region78: #{tpu_custom_call.1} parent=1 // pred_check
      _
    $region79: #{tpu_custom_call.1} parent=1 // pred_check_branch
      %446 = sbr.rel (0) target = $region81
    $region80: #{tpu_custom_call.1} parent=1 // pred_region
      %448 = dma.done [#allocation9], 768
    $region81: #{tpu_custom_call.1} parent=1 // pred_fallthru
      _
    // Predicated region
    $region82: #{tpu_custom_call.1} parent=1 // pred_check
      _
    $region83: #{tpu_custom_call.1} parent=1 // pred_check_branch
      %450 = sbr.rel (0) target = $region85
    $region84: #{tpu_custom_call.1} parent=1 // pred_region
      %452 = dma.done [#allocation17], 32
    $region85: #{tpu_custom_call.1} parent=1 // pred_fallthru
      _
    %453 = vsyncpa [#allocation8], 1
    %454 = vsyncpa [#allocation11], 1
    %455 = vsyncpa [#allocation14], 1
    %456 = vsyncpa [#allocation9], 1
    %457 = vsyncpa [#allocation17], 1

</llo_original>
